<compile_context>
chip_gen: v7x
topology: tpu7x:2x2x1
jax: 0.10.0
libtpu: 0.0.40
codegen_flags: <defaults>
</compile_context>

<pallas_src>
import functools

import jax
import jax.numpy as jnp
from jax.experimental import pallas as pl
from jax.experimental.pallas import tpu as pltpu

EPS = 1e-5
LANE = 128  # lane width; pad feature dims to a multiple of this


def _round_up(n, m):
    return ((n + m - 1) // m) * m


def _pad_to(a, shape):
    widths = [(0, t - s) for s, t in zip(a.shape, shape)]
    if all(w == (0, 0) for w in widths):
        return a
    return jnp.pad(a, widths)


def _bn_relu(h):
    # BatchNorm1d(affine=False), training mode: per-feature stats over the
    # batch axis, biased variance. Center once and reuse; rsqrt goes to EUP.
    mean = jnp.mean(h, axis=0, keepdims=True)
    c = h - mean
    var = jnp.mean(c * c, axis=0, keepdims=True)
    return jnp.maximum(c * jax.lax.rsqrt(var + EPS), 0.0)


def projector_kernel(x_ref, w1_ref, w2_hbm, w3_hbm, o_ref, w2_vmem, w3_vmem, dma_sem):
    # Kick off the layer-2/3 weight DMAs immediately so they overlap with the
    # layer-1 matmul + BN (manual double-buffer-style copies; w2/w3 are the
    # largest operands at production sizes).
    cp_w2 = pltpu.make_async_copy(w2_hbm, w2_vmem, dma_sem.at[0])
    cp_w3 = pltpu.make_async_copy(w3_hbm, w3_vmem, dma_sem.at[1])
    cp_w2.start()
    cp_w3.start()

    # layer1: Linear (bf16 MXU operands, f32 accumulation) -> BN -> ReLU (f32)
    h = jnp.dot(x_ref[...], w1_ref[...], preferred_element_type=jnp.float32)
    h = _bn_relu(h)

    # layer2: Linear -> BN -> ReLU
    cp_w2.wait()
    h = jnp.dot(h.astype(jnp.bfloat16), w2_vmem[...],
                preferred_element_type=jnp.float32)
    h = _bn_relu(h)

    # layer3: Linear (no bias, no BN, no ReLU)
    cp_w3.wait()
    out = jnp.dot(h.astype(jnp.bfloat16), w3_vmem[...],
                  preferred_element_type=jnp.float32)
    o_ref[...] = out.astype(o_ref.dtype)


def prepare_weights(w1_t, w2_t, w3_t):
    """One-time weight prep: lane-pad to multiples of 128 and cast to bf16.

    Call once at init and cache the result.  Zero padding is exact w.r.t. the
    unpadded math: padded hidden columns are identically zero, BN(0-column)=0,
    ReLU(0)=0, and the matching padded weight rows are zero.
    w*_t are (in_features, out_features), i.e. torch W.T.
    """
    in_dim, hidden = w1_t.shape
    out_dim = w3_t.shape[1]
    in_p, hid_p, out_p = (_round_up(d, LANE) for d in (in_dim, hidden, out_dim))
    w1_p = _pad_to(w1_t, (in_p, hid_p)).astype(jnp.bfloat16)
    w2_p = _pad_to(w2_t, (hid_p, hid_p)).astype(jnp.bfloat16)
    w3_p = _pad_to(w3_t, (hid_p, out_p)).astype(jnp.bfloat16)
    return w1_p, w2_p, w3_p, out_dim


@functools.partial(jax.jit, static_argnames=("out_dim",))
def projector_forward(x, w1_p, w2_p, w3_p, *, out_dim):
    """x: (B, in_dim) f32.  w*_p: padded bf16 weights from prepare_weights."""
    B = x.shape[0]
    if B < 2:
        # Matches torch: BatchNorm1d training mode needs >1 value per channel.
        raise ValueError("Projector (training-mode BN) requires batch size >= 2")
    in_p, hid_p = w1_p.shape
    out_p = w3_p.shape[1]

    # x padding/cast is per-call (input-dependent) and tiny; weights are not
    # touched here (already padded + bf16, cached).
    x_p = _pad_to(x.astype(jnp.bfloat16), (B, in_p))

    flops = 2 * B * (in_p * hid_p + hid_p * hid_p + hid_p * out_p)
    bytes_accessed = (2 * (B * in_p + in_p * hid_p + hid_p * hid_p + hid_p * out_p)
                      + 4 * B * out_p)

    # VMEM budget (grid-less, single-buffered): bf16 inputs + scratch weight
    # copies, f32 output + intermediates. Cap below v7x's 64 MiB physical VMEM.
    vmem_need = (2 * (B * in_p + in_p * hid_p + hid_p * hid_p + hid_p * out_p)
                 + 4 * B * out_p + 4 * 3 * B * hid_p)
    vmem_limit = int(min(64 * 2**20, max(8 * 2**20, 2 * vmem_need)))

    vmem_spec = pl.BlockSpec(memory_space=pltpu.MemorySpace.VMEM)
    hbm_spec = pl.BlockSpec(memory_space=pl.ANY)

    out_padded = pl.pallas_call(
        projector_kernel,
        out_shape=jax.ShapeDtypeStruct((B, out_p), jnp.float32),
        in_specs=[vmem_spec, vmem_spec, hbm_spec, hbm_spec],
        out_specs=vmem_spec,
        scratch_shapes=[
            pltpu.VMEM((hid_p, hid_p), jnp.bfloat16),   # w2 landing buffer
            pltpu.VMEM((hid_p, out_p), jnp.bfloat16),   # w3 landing buffer
            pltpu.SemaphoreType.DMA((2,)),
        ],
        compiler_params=pltpu.CompilerParams(vmem_limit_bytes=vmem_limit),
        cost_estimate=pl.CostEstimate(
            flops=flops,
            transcendentals=2 * hid_p,  # two rsqrt rows
            bytes_accessed=bytes_accessed,
        ),
    )(x_p, w1_p, w2_p, w3_p)

    # Slice padded lanes off outside the kernel (fused by XLA under jit).
    return out_padded[:, :out_dim]


def projector_reference(x, w1_t, w2_t, w3_t):
    """Pure-JAX (f32) reference of the same forward pass."""
    def bn_relu(h):
        m = jnp.mean(h, axis=0, keepdims=True)
        v = jnp.mean((h - m) ** 2, axis=0, keepdims=True)
        return jnp.maximum((h - m) / jnp.sqrt(v + EPS), 0.0)

    h = bn_relu(x @ w1_t)
    h = bn_relu(h @ w2_t)
    return h @ w3_t


def init_params(key, in_dim, hidden_dim, out_dim):
    # Deterministic synthetic init (Kaiming-uniform-ish scale like torch Linear).
    k1, k2, k3 = jax.random.split(key, 3)

    def lin(k, fan_in, fan_out):
        bound = 1.0 / jnp.sqrt(fan_in)
        # stored as (in, out) == torch W.T
        return jax.random.uniform(k, (fan_in, fan_out), jnp.float32, -bound, bound)

    w1_t = lin(k1, in_dim, hidden_dim)
    w2_t = lin(k2, hidden_dim, hidden_dim)
    w3_t = lin(k3, hidden_dim, out_dim)
    return w1_t, w2_t, w3_t


if __name__ == "__main__":
    # Small shapes consistent with the module: batch=8, in_dim=32, hidden=64, out=32.
    # (These deliberately exercise the lane-padding path: 32/64 -> 128.)
    B, IN_DIM, HIDDEN_DIM, OUT_DIM = 8, 32, 64, 32

    key = jax.random.PRNGKey(0)
    kx, kp = jax.random.split(key)
    x = jax.random.normal(kx, (B, IN_DIM), jnp.float32)
    w1_t, w2_t, w3_t = init_params(kp, IN_DIM, HIDDEN_DIM, OUT_DIM)

    # One-time prep (padding + bf16 cast) — cached, NOT on the per-call path.
    w1_p, w2_p, w3_p, out_dim = prepare_weights(w1_t, w2_t, w3_t)

    out = projector_forward(x, w1_p, w2_p, w3_p, out_dim=out_dim)
    out = jax.block_until_ready(out)

    # Reference uses the same bf16-quantized parameters/input the kernel
    # consumes (math in f32), so the check isolates the kernel implementation.
    # Remaining deltas: in-kernel bf16 activation casts + MXU accumulation
    # order. Versus the full-f32 torch module the drift is ~1e-2 relative
    # purely from the (review-recommended) bf16 weight quantization.
    x_q = x.astype(jnp.bfloat16).astype(jnp.float32)
    w1_q = w1_p[:IN_DIM, :HIDDEN_DIM].astype(jnp.float32)
    w2_q = w2_p[:HIDDEN_DIM, :HIDDEN_DIM].astype(jnp.float32)
    w3_q = w3_p[:HIDDEN_DIM, :OUT_DIM].astype(jnp.float32)
    ref = projector_reference(x_q, w1_q, w2_q, w3_q)

    assert out.shape == (B, OUT_DIM), out.shape
    assert jnp.allclose(out, ref, atol=2e-2, rtol=2e-2), "mismatch vs reference"

    print("KERNEL_OK")
</pallas_src>

<mosaic_0001>
module attributes {stable_mosaic.version = 11 : i64} {
  func.func @projector_kernel(%arg0: memref<8x128xbf16, #tpu.memory_space<vmem>>, %arg1: memref<128x128xbf16, #tpu.memory_space<vmem>>, %arg2: memref<128x128xbf16, #tpu.memory_space<any>>, %arg3: memref<128x128xbf16, #tpu.memory_space<any>>, %arg4: memref<8x128xf32, #tpu.memory_space<vmem>>, %arg5: memref<128x128xbf16, #tpu.memory_space<vmem>>, %arg6: memref<128x128xbf16, #tpu.memory_space<vmem>>, %arg7: memref<2x!tpu.dma_semaphore, #tpu.memory_space<semaphore_mem>>) attributes {dimension_semantics = [], scalar_prefetch = 0 : i64, scratch_operands = 3 : i64, tpu.core_type = #tpu.core_type<tc>} {
    %c0_i32 = arith.constant 0 : i32
    %0 = tpu.memref_slice %arg7[%c0_i32] : memref<2x!tpu.dma_semaphore, #tpu.memory_space<semaphore_mem>> -> memref<1x!tpu.dma_semaphore, #tpu.memory_space<semaphore_mem>>
    %1 = tpu.memref_squeeze %0 : memref<1x!tpu.dma_semaphore, #tpu.memory_space<semaphore_mem>> -> memref<!tpu.dma_semaphore, #tpu.memory_space<semaphore_mem>>
    tpu.enqueue_dma source(%arg2 : memref<128x128xbf16, #tpu.memory_space<any>>) target(%arg5 : memref<128x128xbf16, #tpu.memory_space<vmem>>) target_semaphore(%1 : memref<!tpu.dma_semaphore, #tpu.memory_space<semaphore_mem>>)
    %c1_i32 = arith.constant 1 : i32
    %2 = tpu.memref_slice %arg7[%c1_i32] : memref<2x!tpu.dma_semaphore, #tpu.memory_space<semaphore_mem>> -> memref<1x!tpu.dma_semaphore, #tpu.memory_space<semaphore_mem>>
    %3 = tpu.memref_squeeze %2 : memref<1x!tpu.dma_semaphore, #tpu.memory_space<semaphore_mem>> -> memref<!tpu.dma_semaphore, #tpu.memory_space<semaphore_mem>>
    tpu.enqueue_dma source(%arg3 : memref<128x128xbf16, #tpu.memory_space<any>>) target(%arg6 : memref<128x128xbf16, #tpu.memory_space<vmem>>) target_semaphore(%3 : memref<!tpu.dma_semaphore, #tpu.memory_space<semaphore_mem>>)
    %c0 = arith.constant 0 : index
    %c0_0 = arith.constant 0 : index
    %4 = vector.load %arg0[%c0, %c0_0] : memref<8x128xbf16, #tpu.memory_space<vmem>>, vector<8x128xbf16>
    %c0_1 = arith.constant 0 : index
    %c0_2 = arith.constant 0 : index
    %5 = vector.load %arg1[%c0_1, %c0_2] : memref<128x128xbf16, #tpu.memory_space<vmem>>, vector<128x128xbf16>
    %cst = arith.constant dense<0.000000e+00> : vector<8x128xf32>
    %6 = tpu.matmul %4, %5, %cst {dimension_numbers = #tpu.dot_dimension_numbers<[1], [0], [0], [1], [0, 0, 1, 1], [], []>} : vector<8x128xbf16>, vector<128x128xbf16>, vector<8x128xf32> -> vector<8x128xf32>
    %cst_3 = arith.constant dense<0.000000e+00> : vector<128xf32>
    %7 = vector.multi_reduction <add>, %6, %cst_3 [0] : vector<8x128xf32> to vector<128xf32>
    %8 = vector.shape_cast %7 : vector<128xf32> to vector<1x128xf32>
    %cst_4 = arith.constant 8.000000e+00 : f32
    %9 = vector.broadcast %cst_4 : f32 to vector<1x128xf32>
    %10 = arith.divf %8, %9 : vector<1x128xf32>
    %11 = vector.broadcast %10 : vector<1x128xf32> to vector<8x128xf32>
    %12 = arith.subf %6, %11 : vector<8x128xf32>
    %13 = arith.mulf %12, %12 : vector<8x128xf32>
    %cst_5 = arith.constant dense<0.000000e+00> : vector<128xf32>
    %14 = vector.multi_reduction <add>, %13, %cst_5 [0] : vector<8x128xf32> to vector<128xf32>
    %15 = vector.shape_cast %14 : vector<128xf32> to vector<1x128xf32>
    %cst_6 = arith.constant 8.000000e+00 : f32
    %16 = vector.broadcast %cst_6 : f32 to vector<1x128xf32>
    %17 = arith.divf %15, %16 : vector<1x128xf32>
    %cst_7 = arith.constant 9.99999974E-6 : f32
    %18 = vector.broadcast %cst_7 : f32 to vector<1x128xf32>
    %19 = arith.addf %17, %18 : vector<1x128xf32>
    %20 = math.rsqrt %19 : vector<1x128xf32>
    %21 = vector.broadcast %20 : vector<1x128xf32> to vector<8x128xf32>
    %22 = arith.mulf %12, %21 : vector<8x128xf32>
    %cst_8 = arith.constant 0.000000e+00 : f32
    %23 = vector.broadcast %cst_8 : f32 to vector<8x128xf32>
    %24 = arith.maximumf %22, %23 : vector<8x128xf32>
    %c0_i32_9 = arith.constant 0 : i32
    %25 = tpu.memref_slice %arg7[%c0_i32_9] : memref<2x!tpu.dma_semaphore, #tpu.memory_space<semaphore_mem>> -> memref<1x!tpu.dma_semaphore, #tpu.memory_space<semaphore_mem>>
    %26 = tpu.memref_squeeze %25 : memref<1x!tpu.dma_semaphore, #tpu.memory_space<semaphore_mem>> -> memref<!tpu.dma_semaphore, #tpu.memory_space<semaphore_mem>>
    tpu.wait_dma2 semaphore(%26 : memref<!tpu.dma_semaphore, #tpu.memory_space<semaphore_mem>>) src(%arg2 : memref<128x128xbf16, #tpu.memory_space<any>>) dst(%arg5 : memref<128x128xbf16, #tpu.memory_space<vmem>>)
    %27 = arith.truncf %24 : vector<8x128xf32> to vector<8x128xbf16>
    %c0_10 = arith.constant 0 : index
    %c0_11 = arith.constant 0 : index
    %28 = vector.load %arg5[%c0_10, %c0_11] : memref<128x128xbf16, #tpu.memory_space<vmem>>, vector<128x128xbf16>
    %cst_12 = arith.constant dense<0.000000e+00> : vector<8x128xf32>
    %29 = tpu.matmul %27, %28, %cst_12 {dimension_numbers = #tpu.dot_dimension_numbers<[1], [0], [0], [1], [0, 0, 1, 1], [], []>} : vector<8x128xbf16>, vector<128x128xbf16>, vector<8x128xf32> -> vector<8x128xf32>
    %cst_13 = arith.constant dense<0.000000e+00> : vector<128xf32>
    %30 = vector.multi_reduction <add>, %29, %cst_13 [0] : vector<8x128xf32> to vector<128xf32>
    %31 = vector.shape_cast %30 : vector<128xf32> to vector<1x128xf32>
    %cst_14 = arith.constant 8.000000e+00 : f32
    %32 = vector.broadcast %cst_14 : f32 to vector<1x128xf32>
    %33 = arith.divf %31, %32 : vector<1x128xf32>
    %34 = vector.broadcast %33 : vector<1x128xf32> to vector<8x128xf32>
    %35 = arith.subf %29, %34 : vector<8x128xf32>
    %36 = arith.mulf %35, %35 : vector<8x128xf32>
    %cst_15 = arith.constant dense<0.000000e+00> : vector<128xf32>
    %37 = vector.multi_reduction <add>, %36, %cst_15 [0] : vector<8x128xf32> to vector<128xf32>
    %38 = vector.shape_cast %37 : vector<128xf32> to vector<1x128xf32>
    %cst_16 = arith.constant 8.000000e+00 : f32
    %39 = vector.broadcast %cst_16 : f32 to vector<1x128xf32>
    %40 = arith.divf %38, %39 : vector<1x128xf32>
    %cst_17 = arith.constant 9.99999974E-6 : f32
    %41 = vector.broadcast %cst_17 : f32 to vector<1x128xf32>
    %42 = arith.addf %40, %41 : vector<1x128xf32>
    %43 = math.rsqrt %42 : vector<1x128xf32>
    %44 = vector.broadcast %43 : vector<1x128xf32> to vector<8x128xf32>
    %45 = arith.mulf %35, %44 : vector<8x128xf32>
    %cst_18 = arith.constant 0.000000e+00 : f32
    %46 = vector.broadcast %cst_18 : f32 to vector<8x128xf32>
    %47 = arith.maximumf %45, %46 : vector<8x128xf32>
    %c1_i32_19 = arith.constant 1 : i32
    %48 = tpu.memref_slice %arg7[%c1_i32_19] : memref<2x!tpu.dma_semaphore, #tpu.memory_space<semaphore_mem>> -> memref<1x!tpu.dma_semaphore, #tpu.memory_space<semaphore_mem>>
    %49 = tpu.memref_squeeze %48 : memref<1x!tpu.dma_semaphore, #tpu.memory_space<semaphore_mem>> -> memref<!tpu.dma_semaphore, #tpu.memory_space<semaphore_mem>>
    tpu.wait_dma2 semaphore(%49 : memref<!tpu.dma_semaphore, #tpu.memory_space<semaphore_mem>>) src(%arg3 : memref<128x128xbf16, #tpu.memory_space<any>>) dst(%arg6 : memref<128x128xbf16, #tpu.memory_space<vmem>>)
    %50 = arith.truncf %47 : vector<8x128xf32> to vector<8x128xbf16>
    %c0_20 = arith.constant 0 : index
    %c0_21 = arith.constant 0 : index
    %51 = vector.load %arg6[%c0_20, %c0_21] : memref<128x128xbf16, #tpu.memory_space<vmem>>, vector<128x128xbf16>
    %cst_22 = arith.constant dense<0.000000e+00> : vector<8x128xf32>
    %52 = tpu.matmul %50, %51, %cst_22 {dimension_numbers = #tpu.dot_dimension_numbers<[1], [0], [0], [1], [0, 0, 1, 1], [], []>} : vector<8x128xbf16>, vector<128x128xbf16>, vector<8x128xf32> -> vector<8x128xf32>
    %c0_23 = arith.constant 0 : index
    %c0_24 = arith.constant 0 : index
    %53 = vector.load %arg4[%c0_23, %c0_24] : memref<8x128xf32, #tpu.memory_space<vmem>>, vector<8x128xf32>
    tpu.vector_store %arg4[%c0_23, %c0_24], %52 {strides = array<i32>} : memref<8x128xf32, #tpu.memory_space<vmem>>, vector<8x128xf32>,
    return
  }
}

</mosaic_0001>

<llo_original>
// kernel: projector_forward.1
$region0: #{projector_forward.1}
  #allocation0 [shape = 'u32[]', space=smem, size = 0x4, offset = 0x4, fixed_abs, tag = 'smem constant byte address 0x4 - core index']
  #allocation1 [shape = 'u32[144,128]{1,0:T(1,128)}', space=vmem, size = 0x12000, scoped, tag = 'internal scratch']
  #allocation2 [shape = 'bf16[128,128]{1,0:T(16,128)(2,1)}', space=vmem, size = 0x8000, scoped, tag = 'scratch operand']
  #allocation3 [shape = 'bf16[128,128]{1,0:T(16,128)(2,1)}', space=vmem, size = 0x8000, scoped, tag = 'scratch operand']
  #allocation4 [shape = 's32[2]{0}', space=sflag, size = 0x8, scoped, tag = 'scratch operand']
  #allocation9 [shape = 's32[]', space=sflag, size = 0x4, offset = 0, fixed_abs, tag = 'sflag constant byte address 0x0 - dummy sync flag']
  #allocation10 [shape = 's32[]', space=sflag, size = 0x4, offset = 0, fixed_abs, tag = 'sflag constant byte address 0x0 - dummy sync flag']
  #allocation11 [shape = 'u32[]', space=smem, size = 0x4, offset = 0x44, fixed_abs, tag = 'smem constant byte address 0x44 - assertion arg 0']
  #allocation12 [shape = 'u32[]', space=smem, size = 0x4, offset = 0x48, fixed_abs, tag = 'smem constant byte address 0x48 - assertion arg 1']
  #allocation13 [shape = 's32[]', space=sflag, size = 0x4, offset = 0, fixed_abs, tag = 'sflag constant byte address 0x0 - dummy sync flag']
  #allocation14 [shape = 's32[]', space=sflag, size = 0x4, offset = 0, fixed_abs, tag = 'sflag constant byte address 0x0 - dummy sync flag']
  %s0 = inlined_call_operand.vmem [shape: bf16[8,128], index: 0, kind: input, shape index: {}]
  %s1 = inlined_call_operand.hbm [shape: bf16[128,128], index: 1, kind: input, shape index: {}]
  %s2 = inlined_call_operand.hbm [shape: bf16[128,128], index: 2, kind: input, shape index: {}]
  %s3 = inlined_call_operand.hbm [shape: bf16[128,128], index: 3, kind: input, shape index: {}]
  %s4 = inlined_call_operand.hbm [shape: f32[8,128], index: 4, kind: output, shape index: {}]
  %s5 = sld [smem:[#allocation0]]
  $region30: #{projector_forward.1} parent=0
    _
  %s7 = ssub.s32 1, %s5
  %s8 = scalar_select 0, %s7, %s5
  $region1: #{projector_forward.1} parent=0
    #allocation5 [shape = 'u8[32768]{0}', space=vmem, size = 0x8000, scoped, tag = 'input window, operand 1, single buffered']
    #allocation6 [shape = 's32[1]{0}', space=sflag, size = 0x4, scoped, tag = 'scoped memory for projector_forward.1']
    #allocation7 [shape = 's32[1]{0}', space=sflag, size = 0x4, scoped, tag = 'scoped memory for projector_forward.1']
    #allocation8 [shape = 'u8[4096]{0}', space=vmem, size = 0x1000, scoped, tag = 'output window, operand 0, single buffered']
    %9 = vsyncpa [#allocation6], 0
    %10 = vsyncpa [#allocation7], 0
    // Predicated region
    $region2: #{projector_forward.1} parent=1 // pred_check
      _
    $region3: #{projector_forward.1} parent=1 // pred_check_branch
      %12 = sbr.rel (0) target = $region5
    $region4: #{projector_forward.1} parent=1 // pred_region
      _
    $region5: #{projector_forward.1} parent=1 // pred_fallthru
      _
    // Predicated region
    $region6: #{projector_forward.1} parent=1 // pred_check
      _
    $region7: #{projector_forward.1} parent=1 // pred_check_branch
      %14 = sbr.rel (0) target = $region9
    $region8: #{projector_forward.1} parent=1 // pred_region
      %s16 = ssub.s32 1024, 1024
      %17 = vsyncadd [#allocation6], %s16
      %s18 = sshll.u32 [#allocation5], 4
      %s19 = int_to_ptr.vmem [resolvable:$true] %s18
      %24 = dma.hbm_to_vmem [thread:$0]  %s1, 1024, %s19, [#allocation6], 64, 64, 4
    $region9: #{projector_forward.1} parent=1 // pred_fallthru
      _
    // Predicated region
    $region10: #{projector_forward.1} parent=1 // pred_check
      _
    $region11: #{projector_forward.1} parent=1 // pred_check_branch
      %26 = sbr.rel (0) target = $region13
    $region12: #{projector_forward.1} parent=1 // pred_region
      %27 = dma.done [#allocation6], 1024
    $region13: #{projector_forward.1} parent=1 // pred_fallthru
      _
    // Predicated region
    $region14: #{projector_forward.1} parent=1 // pred_check
      _
    $region15: #{projector_forward.1} parent=1 // pred_check_branch
      %30 = sbr.rel target = $region17
    $region16: #{projector_forward.1} parent=1 // pred_region
      %31 = sst [smem:[#allocation11]] [#allocation10]
      %32 = sst [smem:[#allocation12]] [#allocation9]
    $region17: #{projector_forward.1} parent=1 // pred_fallthru
      _
    %34 = shalt.err (0)
    %s36 = sshll.u32 [#allocation2], 4
    %s37 = int_to_ptr.vmem [resolvable:$true] %s36
    %39 = dma.hbm_to_vmem [thread:$0]  %s2, 1024, %s37, [#allocation4]
    %s40 = scalar_lea.sflag [#allocation4], 1
    // Predicated region
    $region18: #{projector_forward.1} parent=1 // pred_check
      _
    $region19: #{projector_forward.1} parent=1 // pred_check_branch
      %42 = sbr.rel target = $region21
    $region20: #{projector_forward.1} parent=1 // pred_region
      %43 = sst [smem:[#allocation11]] [#allocation14]
      %44 = sst [smem:[#allocation12]] [#allocation13]
    $region21: #{projector_forward.1} parent=1 // pred_fallthru
      _
    %46 = shalt.err (0)
    %s48 = sshll.u32 [#allocation3], 4
    %s49 = int_to_ptr.vmem [resolvable:$true] %s48
    %51 = dma.hbm_to_vmem [thread:$0]  %s3, 1024, %s49, %s40
    %v52 = vld [vmem:[%s0] sm:$0xf]
    %v53 = vld [vmem:[#allocation5] sm:$0xf]
    %v54 = vld [vmem:[#allocation5 + $0x4] sm:$0xf]
    %v55 = vld [vmem:[#allocation5 + $0x8] sm:$0xf]
    %v56 = vld [vmem:[#allocation5 + $0xc] sm:$0xf]
    %v57 = vld [vmem:[#allocation5 + $0x10] sm:$0xf]
    %v58 = vld [vmem:[#allocation5 + $0x14] sm:$0xf]
    %v59 = vld [vmem:[#allocation5 + $0x18] sm:$0xf]
    %v60 = vld [vmem:[#allocation5 + $0x1c] sm:$0xf]
    %v61 = vld [vmem:[#allocation5 + $0x20] sm:$0xf]
    %v62 = vld [vmem:[#allocation5 + $0x24] sm:$0xf]
    %v63 = vld [vmem:[#allocation5 + $0x28] sm:$0xf]
    %v64 = vld [vmem:[#allocation5 + $0x2c] sm:$0xf]
    %v65 = vld [vmem:[#allocation5 + $0x30] sm:$0xf]
    %v66 = vld [vmem:[#allocation5 + $0x34] sm:$0xf]
    %v67 = vld [vmem:[#allocation5 + $0x38] sm:$0xf]
    %v68 = vld [vmem:[#allocation5 + $0x3c] sm:$0xf]
    %v85 = vunpack.c.l.b16 %v53
    %v86 = vunpack.c.l.b16 %v54
    %v87 = vunpack.c.l.b16 %v55
    %v88 = vunpack.c.l.b16 %v56
    %v89 = vunpack.c.l.b16 %v57
    %v90 = vunpack.c.l.b16 %v58
    %v91 = vunpack.c.l.b16 %v59
    %v92 = vunpack.c.l.b16 %v60
    %v93 = vunpack.c.l.b16 %v61
    %v94 = vunpack.c.l.b16 %v62
    %v95 = vunpack.c.l.b16 %v63
    %v96 = vunpack.c.l.b16 %v64
    %v97 = vunpack.c.l.b16 %v65
    %v98 = vunpack.c.l.b16 %v66
    %v99 = vunpack.c.l.b16 %v67
    %v100 = vunpack.c.l.b16 %v68
    %v101 = vpack.c.b16 %v86, %v85
    %v102 = vpack.c.b16 %v88, %v87
    %v103 = vpack.c.b16 %v90, %v89
    %v104 = vpack.c.b16 %v92, %v91
    %v105 = vpack.c.b16 %v94, %v93
    %v106 = vpack.c.b16 %v96, %v95
    %v107 = vpack.c.b16 %v98, %v97
    %v108 = vpack.c.b16 %v100, %v99
    %117 = vmatprep.subr.bf16.mxu0 0
    %118 = vmatpush1.bf16.msra.mxu0 %v101
    %119 = vmatprep.subr.bf16.mxu0 0
    %120 = vmatpush1.bf16.msra.mxu0 %v102
    %121 = vmatprep.subr.bf16.mxu0 0
    %122 = vmatpush1.bf16.msra.mxu0 %v103
    %123 = vmatprep.subr.bf16.mxu0 0
    %124 = vmatpush1.bf16.msra.mxu0 %v104
    %125 = vmatprep.subr.bf16.mxu0 0
    %126 = vmatpush1.bf16.msra.mxu0 %v105
    %127 = vmatprep.subr.bf16.mxu0 0
    %128 = vmatpush1.bf16.msra.mxu0 %v106
    %129 = vmatprep.subr.bf16.mxu0 0
    %130 = vmatpush1.bf16.msra.mxu0 %v107
    %131 = vmatprep.subr.bf16.mxu0 0
    %132 = vmatpush1.bf16.msra.mxu0 %v108
    %133 = vmatprep.subr.bf16.mxu0 0
    %134 = vmatpush1.bf16.msra.mxu0 0
    %135 = vmatprep.subr.bf16.mxu0 0
    %136 = vmatpush1.bf16.msra.mxu0 0
    %137 = vmatprep.subr.bf16.mxu0 0
    %138 = vmatpush1.bf16.msra.mxu0 0
    %139 = vmatprep.subr.bf16.mxu0 0
    %140 = vmatpush1.bf16.msra.mxu0 0
    %141 = vmatprep.subr.bf16.mxu0 0
    %142 = vmatpush1.bf16.msra.mxu0 0
    %143 = vmatprep.subr.bf16.mxu0 0
    %144 = vmatpush1.bf16.msra.mxu0 0
    %145 = vmatprep.subr.bf16.mxu0 0
    %146 = vmatpush1.bf16.msra.mxu0 0
    %147 = vmatprep.subr.bf16.mxu0 0
    %148 = vmatpush1.bf16.msra.mxu0 0
    %149 = vmatprep.mubr.bf16.mxu0 0
    %150 = vmatmul.mubr.bf16.gmra.mrb[0].mxu0 %v52
    %v151 = vpop.f32.mrb[0].mxu0
    %v152 = vadd.f32 0.0, %v151
    %v153 = vpop.f32.mrb[0].mxu0
    %v154 = vpop.f32.mrb[0].mxu0
    %v155 = vpop.f32.mrb[0].mxu0
    %156 = vdwg.mxu0
    %v157 = vrot.slane %v152, 4
    %v158 = vadd.f32 %v152, %v157
    %v159 = vrot.slane %v158, 2
    %v160 = vadd.f32 %v158, %v159
    %v161 = vrot.slane %v160, 1
    %v162 = vadd.f32 %v160, %v161
    %v163 = vrcp.pop 8.0
    %v164 = vmul.f32 %v162, %v163
    %v165 = vsub.f32 %v152, %v164
    %v166 = vmul.f32 %v165, %v165
    %v167 = vrot.slane %v166, 4
    %v168 = vadd.f32 %v166, %v167
    %v169 = vrot.slane %v168, 2
    %v170 = vadd.f32 %v168, %v169
    %v171 = vrot.slane %v170, 1
    %v172 = vadd.f32 %v170, %v171
    %v173 = vmul.f32 %v172, %v163
    %v174 = vadd.f32 %v173, 1e-05
    %v175 = vrsqrt.pop %v174
    %v176 = vmul.f32 %v165, %v175
    %v177 = vmax.f32 %v176, 0.0
    %s178 = smul.u32 4, 16
    %s179 = smul.u32 %s178, 1
    %s180 = sshll.u32 %s179, 4
    %181 = dma.done [#allocation4], %s180
    %v182 = vpack.c.bf16 %v177, %v177
    %v183 = vld [vmem:[#allocation2] sm:$0xff]
    %v184 = vld [vmem:[#allocation2 + $0x8] sm:$0xff]
    %v185 = vld [vmem:[#allocation2 + $0x10] sm:$0xff]
    %v186 = vld [vmem:[#allocation2 + $0x18] sm:$0xff]
    %v187 = vld [vmem:[#allocation2 + $0x20] sm:$0xff]
    %v188 = vld [vmem:[#allocation2 + $0x28] sm:$0xff]
    %v189 = vld [vmem:[#allocation2 + $0x30] sm:$0xff]
    %v190 = vld [vmem:[#allocation2 + $0x38] sm:$0xff]
    %191 = vmatprep.subr.bf16.mxu0 0
    %192 = vmatpush1.bf16.msra.mxu0 %v183
    %193 = vmatprep.subr.bf16.mxu0 0
    %194 = vmatpush1.bf16.msra.mxu0 %v184
    %195 = vmatprep.subr.bf16.mxu0 0
    %196 = vmatpush1.bf16.msra.mxu0 %v185
    %197 = vmatprep.subr.bf16.mxu0 0
    %198 = vmatpush1.bf16.msra.mxu0 %v186
    %199 = vmatprep.subr.bf16.mxu0 0
    %200 = vmatpush1.bf16.msra.mxu0 %v187
    %201 = vmatprep.subr.bf16.mxu0 0
    %202 = vmatpush1.bf16.msra.mxu0 %v188
    %203 = vmatprep.subr.bf16.mxu0 0
    %204 = vmatpush1.bf16.msra.mxu0 %v189
    %205 = vmatprep.subr.bf16.mxu0 0
    %206 = vmatpush1.bf16.msra.mxu0 %v190
    %207 = vmatprep.subr.bf16.mxu0 0
    %208 = vmatpush1.bf16.msra.mxu0 0
    %209 = vmatprep.subr.bf16.mxu0 0
    %210 = vmatpush1.bf16.msra.mxu0 0
    %211 = vmatprep.subr.bf16.mxu0 0
    %212 = vmatpush1.bf16.msra.mxu0 0
    %213 = vmatprep.subr.bf16.mxu0 0
    %214 = vmatpush1.bf16.msra.mxu0 0
    %215 = vmatprep.subr.bf16.mxu0 0
    %216 = vmatpush1.bf16.msra.mxu0 0
    %217 = vmatprep.subr.bf16.mxu0 0
    %218 = vmatpush1.bf16.msra.mxu0 0
    %219 = vmatprep.subr.bf16.mxu0 0
    %220 = vmatpush1.bf16.msra.mxu0 0
    %221 = vmatprep.subr.bf16.mxu0 0
    %222 = vmatpush1.bf16.msra.mxu0 0
    %223 = vmatprep.mubr.bf16.mxu0 0
    %224 = vmatmul.mubr.bf16.gmra.mrb[0].mxu0 %v182
    %v225 = vpop.f32.mrb[0].mxu0
    %v226 = vadd.f32 0.0, %v225
    %v227 = vpop.f32.mrb[0].mxu0
    %v228 = vpop.f32.mrb[0].mxu0
    %v229 = vpop.f32.mrb[0].mxu0
    %230 = vdwg.mxu0
    %v231 = vrot.slane %v226, 4
    %v232 = vadd.f32 %v226, %v231
    %v233 = vrot.slane %v232, 2
    %v234 = vadd.f32 %v232, %v233
    %v235 = vrot.slane %v234, 1
    %v236 = vadd.f32 %v234, %v235
    %v237 = vmul.f32 %v236, %v163
    %v238 = vsub.f32 %v226, %v237
    %v239 = vmul.f32 %v238, %v238
    %v240 = vrot.slane %v239, 4
    %v241 = vadd.f32 %v239, %v240
    %v242 = vrot.slane %v241, 2
    %v243 = vadd.f32 %v241, %v242
    %v244 = vrot.slane %v243, 1
    %v245 = vadd.f32 %v243, %v244
    %v246 = vmul.f32 %v245, %v163
    %v247 = vadd.f32 %v246, 1e-05
    %v248 = vrsqrt.pop %v247
    %v249 = vmul.f32 %v238, %v248
    %v250 = vmax.f32 %v249, 0.0
    %s251 = sshll.u32 %s179, 4
    %252 = dma.done %s40, %s251
    %v253 = vpack.c.bf16 %v250, %v250
    %v254 = vld [vmem:[#allocation3] sm:$0xff]
    %v255 = vld [vmem:[#allocation3 + $0x8] sm:$0xff]
    %v256 = vld [vmem:[#allocation3 + $0x10] sm:$0xff]
    %v257 = vld [vmem:[#allocation3 + $0x18] sm:$0xff]
    %v258 = vld [vmem:[#allocation3 + $0x20] sm:$0xff]
    %v259 = vld [vmem:[#allocation3 + $0x28] sm:$0xff]
    %v260 = vld [vmem:[#allocation3 + $0x30] sm:$0xff]
    %v261 = vld [vmem:[#allocation3 + $0x38] sm:$0xff]
    %262 = vmatprep.subr.bf16.mxu0 0
    %263 = vmatpush1.bf16.msra.mxu0 %v254
    %264 = vmatprep.subr.bf16.mxu0 0
    %265 = vmatpush1.bf16.msra.mxu0 %v255
    %266 = vmatprep.subr.bf16.mxu0 0
    %267 = vmatpush1.bf16.msra.mxu0 %v256
    %268 = vmatprep.subr.bf16.mxu0 0
    %269 = vmatpush1.bf16.msra.mxu0 %v257
    %270 = vmatprep.subr.bf16.mxu0 0
    %271 = vmatpush1.bf16.msra.mxu0 %v258
    %272 = vmatprep.subr.bf16.mxu0 0
    %273 = vmatpush1.bf16.msra.mxu0 %v259
    %274 = vmatprep.subr.bf16.mxu0 0
    %275 = vmatpush1.bf16.msra.mxu0 %v260
    %276 = vmatprep.subr.bf16.mxu0 0
    %277 = vmatpush1.bf16.msra.mxu0 %v261
    %278 = vmatprep.subr.bf16.mxu0 0
    %279 = vmatpush1.bf16.msra.mxu0 0
    %280 = vmatprep.subr.bf16.mxu0 0
    %281 = vmatpush1.bf16.msra.mxu0 0
    %282 = vmatprep.subr.bf16.mxu0 0
    %283 = vmatpush1.bf16.msra.mxu0 0
    %284 = vmatprep.subr.bf16.mxu0 0
    %285 = vmatpush1.bf16.msra.mxu0 0
    %286 = vmatprep.subr.bf16.mxu0 0
    %287 = vmatpush1.bf16.msra.mxu0 0
    %288 = vmatprep.subr.bf16.mxu0 0
    %289 = vmatpush1.bf16.msra.mxu0 0
    %290 = vmatprep.subr.bf16.mxu0 0
    %291 = vmatpush1.bf16.msra.mxu0 0
    %292 = vmatprep.subr.bf16.mxu0 0
    %293 = vmatpush1.bf16.msra.mxu0 0
    %294 = vmatprep.mubr.bf16.mxu0 0
    %295 = vmatmul.mubr.bf16.gmra.mrb[0].mxu0 %v253
    %v296 = vpop.f32.mrb[0].mxu0
    %v297 = vadd.f32 0.0, %v296
    %v298 = vpop.f32.mrb[0].mxu0
    %v299 = vpop.f32.mrb[0].mxu0
    %v300 = vpop.f32.mrb[0].mxu0
    %301 = vdwg.mxu0
    %302 = vst [vmem:[#allocation8] sm:$0xff] %v297
    // Predicated region
    $region22: #{projector_forward.1} parent=1 // pred_check
      _
    $region23: #{projector_forward.1} parent=1 // pred_check_branch
      %304 = sbr.rel (0) target = $region25
    $region24: #{projector_forward.1} parent=1 // pred_region
      %s306 = ssub.s32 128, 128
      %307 = vsyncadd [#allocation7], %s306
      %s309 = sshll.u32 [#allocation8], 4
      %s310 = int_to_ptr.vmem [resolvable:$true] %s309
      %312 = dma.vmem_to_hbm [thread:$0]  %s310, 128, %s4, [#allocation7]
    $region25: #{projector_forward.1} parent=1 // pred_fallthru
      _
    // Predicated region
    $region26: #{projector_forward.1} parent=1 // pred_check
      _
    $region27: #{projector_forward.1} parent=1 // pred_check_branch
      %314 = sbr.rel (0) target = $region29
    $region28: #{projector_forward.1} parent=1 // pred_region
      %315 = dma.done [#allocation7], 128
    $region29: #{projector_forward.1} parent=1 // pred_fallthru
      _
    %316 = vsyncpa [#allocation6], 1
    %317 = vsyncpa [#allocation7], 1
  %318 = vsyncmov [#allocation4]
  %s319 = vpop.sfrf %318
  %p320 = scmp.eq.s32.totalorder %s319, 0
  %p321 = pneg %p320
  %323 = shalt.err (%p321)
  %s324 = scalar_lea.sflag [#allocation4], 1
  %325 = vsyncmov %s324
  %s326 = vpop.sfrf %325
  %p327 = scmp.eq.s32.totalorder %s326, 0
  %p328 = pneg %p327
  %330 = shalt.err (%p328)

</llo_original>
